<compile_context>
chip_gen: v7x
topology: tpu7x:2x2x1
jax: 0.10.0
libtpu: 0.0.40
codegen_flags: <defaults>
</compile_context>

<pallas_src>
import functools
import math

import jax
import jax.numpy as jnp
from jax.experimental import pallas as pl
from jax.experimental.pallas import tpu as pltpu


def _round_up(x, m):
    return ((x + m - 1) // m) * m


def film_kernel(x_ref, w_ref, b_ref, o_ref, *, fp):
    # One batch tile: a single fused matmul against [W_lin | W_gamma | W_beta]
    # (each block fp columns, fp % 128 == 0), then FiLM modulation + LeakyReLU.
    x = x_ref[...]
    acc = jnp.dot(x, w_ref[...], preferred_element_type=jnp.float32)
    acc = acc + b_ref[...]                       # (1, 3*fp) row, implicit broadcast

    lin = acc[:, 0 * fp:1 * fp]                  # 128-aligned lane slices
    gamma = acc[:, 1 * fp:2 * fp]
    beta = acc[:, 2 * fp:3 * fp]

    y = gamma * lin + beta
    o_ref[...] = jnp.where(y >= 0, y, 0.01 * y).astype(o_ref.dtype)


def film_forward(x, w_lin, b_lin, w_film, b_film, *, tm=256):
    """x: [N, F_in]; w_lin: [F_in, F_out]; b_lin: [1, F_out];
    w_film: [F_in, 2*F_out]; b_film: [1, 2*F_out] -> [N, F_out]."""
    N, F_in = x.shape
    F_out = w_lin.shape[1]
    itemsize = jnp.dtype(x.dtype).itemsize

    # ---- host-side weight prep (layout plumbing; folds into the surrounding jit) ----
    Fp = _round_up(F_out, 128)                   # lane-dense output width

    def pad_cols(a):
        return jnp.pad(a, ((0, 0), (0, Fp - a.shape[-1])))

    w_gamma, w_beta = w_film[:, :F_out], w_film[:, F_out:]
    b_gamma, b_beta = b_film[:, :F_out], b_film[:, F_out:]
    w_cat = jnp.concatenate(
        [pad_cols(w_lin), pad_cols(w_gamma), pad_cols(w_beta)], axis=1)
    b_cat = jnp.concatenate(
        [pad_cols(b_lin), pad_cols(b_gamma), pad_cols(b_beta)], axis=1)

    # ---- batch tile sizing with an explicit VMEM budget (v7x has 64 MiB physical) ----
    tm_eff = min(tm, _round_up(max(N, 1), 8))    # no point tiling past the batch

    def est_bytes(t):
        # resident fused weight + bias (assume 2 buffers) + double-buffered x / out tiles
        w_bytes = 2 * (F_in * 3 * Fp + 3 * Fp) * itemsize
        x_bytes = 2 * t * F_in * itemsize
        o_bytes = 2 * t * Fp * itemsize
        return w_bytes + x_bytes + o_bytes

    VMEM_BUDGET = 32 << 20
    while tm_eff > 8 and est_bytes(tm_eff) > VMEM_BUDGET:
        tm_eff //= 2

    Np = _round_up(N, tm_eff)
    x_p = jnp.pad(x, ((0, Np - N), (0, 0))) if Np != N else x

    vmem_limit = int(min(64 << 20, max(32 << 20, 2 * est_bytes(tm_eff))))

    out = pl.pallas_call(
        functools.partial(film_kernel, fp=Fp),
        out_shape=jax.ShapeDtypeStruct((Np, Fp), x.dtype),
        grid_spec=pltpu.PrefetchScalarGridSpec(
            num_scalar_prefetch=0,
            grid=(Np // tm_eff,),
            in_specs=[
                pl.BlockSpec((tm_eff, F_in), lambda i: (i, 0)),     # x batch tile
                pl.BlockSpec((F_in, 3 * Fp), lambda i: (0, 0)),     # fused weights (resident)
                pl.BlockSpec((1, 3 * Fp), lambda i: (0, 0)),        # fused bias (resident)
            ],
            out_specs=pl.BlockSpec((tm_eff, Fp), lambda i: (i, 0)),
        ),
        compiler_params=pltpu.CompilerParams(
            dimension_semantics=("parallel",),                      # shard batch over TCs
            vmem_limit_bytes=vmem_limit,
        ),
    )(x_p, w_cat, b_cat)

    # strip batch padding and the lane padding of the output
    return out[:N, :F_out]


def init_params(key, in_features, out_features, dtype=jnp.float32):
    """Deterministic init mirroring PyTorch: kaiming_uniform_(a=sqrt(5)) on weights
    (bound = 1/sqrt(fan_in)), default nn.Linear uniform bias (same bound)."""
    k1, k2, k3, k4 = jax.random.split(key, 4)
    bound = 1.0 / math.sqrt(in_features)
    # stored pre-transposed: [in_features, out_features]
    w_lin = jax.random.uniform(k1, (in_features, out_features), dtype,
                               minval=-bound, maxval=bound)
    b_lin = jax.random.uniform(k2, (1, out_features), dtype,
                               minval=-bound, maxval=bound)
    w_film = jax.random.uniform(k3, (in_features, 2 * out_features), dtype,
                                minval=-bound, maxval=bound)
    b_film = jax.random.uniform(k4, (1, 2 * out_features), dtype,
                                minval=-bound, maxval=bound)
    return w_lin, b_lin, w_film, b_film


def film_reference(x, w_lin, b_lin, w_film, b_film):
    film = x @ w_film + b_film
    F_out = w_lin.shape[1]
    gamma, beta = film[:, :F_out], film[:, F_out:]
    lin = x @ w_lin + b_lin
    y = gamma * lin + beta
    return jnp.where(y >= 0, y, 0.01 * y)


if __name__ == "__main__":
    key = jax.random.PRNGKey(0)
    kx, kp = jax.random.split(key)

    N, in_features, out_features = 8, 32, 64
    x = jax.random.normal(kx, (N, in_features), jnp.float32)
    w_lin, b_lin, w_film, b_film = init_params(kp, in_features, out_features)

    out = film_forward(x, w_lin, b_lin, w_film, b_film, tm=256)
    out = jax.block_until_ready(out)

    ref = film_reference(x, w_lin, b_lin, w_film, b_film)
    assert out.shape == (N, out_features)
    assert jnp.allclose(out, ref, atol=1e-5, rtol=1e-5), "mismatch vs reference"

    # Larger, non-tile-aligned batch to exercise padding + multi-step grid.
    N2 = 300
    x2 = jax.random.normal(jax.random.PRNGKey(1), (N2, in_features), jnp.float32)
    out2 = jax.block_until_ready(film_forward(x2, w_lin, b_lin, w_film, b_film, tm=256))
    ref2 = film_reference(x2, w_lin, b_lin, w_film, b_film)
    assert out2.shape == (N2, out_features)
    assert jnp.allclose(out2, ref2, atol=1e-5, rtol=1e-5), "mismatch vs reference (padded batch)"

    print("KERNEL_OK")
</pallas_src>

<mosaic_0001>
module attributes {stable_mosaic.version = 11 : i64} {
  func.func @film_kernel(%arg0: i32, %arg1: memref<8x32xf32, #tpu.memory_space<vmem>>, %arg2: memref<32x384xf32, #tpu.memory_space<vmem>>, %arg3: memref<1x384xf32, #tpu.memory_space<vmem>>, %arg4: memref<8x128xf32, #tpu.memory_space<vmem>>) attributes {dimension_semantics = [#tpu.dimension_semantics<parallel>], iteration_bounds = array<i64: 1>, scalar_prefetch = 0 : i64, scratch_operands = 0 : i64, tpu.core_type = #tpu.core_type<tc>, window_params = [{transform_indices = @transform_0, window_bounds = array<i64: 8, 32>}, {pipeline_mode = #tpu.pipeline_mode<synchronous>, transform_indices = @transform_1, window_bounds = array<i64: 32, 384>}, {pipeline_mode = #tpu.pipeline_mode<synchronous>, transform_indices = @transform_2, window_bounds = array<i64: 1, 384>}, {transform_indices = @transform_3, window_bounds = array<i64: 8, 128>}]} {
    %c0 = arith.constant 0 : index
    %c0_0 = arith.constant 0 : index
    %0 = vector.load %arg1[%c0, %c0_0] : memref<8x32xf32, #tpu.memory_space<vmem>>, vector<8x32xf32>
    %c0_1 = arith.constant 0 : index
    %c0_2 = arith.constant 0 : index
    %1 = vector.load %arg2[%c0_1, %c0_2] : memref<32x384xf32, #tpu.memory_space<vmem>>, vector<32x384xf32>
    %cst = arith.constant dense<0.000000e+00> : vector<8x384xf32>
    %2 = tpu.matmul %0, %1, %cst {dimension_numbers = #tpu.dot_dimension_numbers<[1], [0], [0], [1], [0, 0, 1, 1], [], []>} : vector<8x32xf32>, vector<32x384xf32>, vector<8x384xf32> -> vector<8x384xf32>
    %c0_3 = arith.constant 0 : index
    %c0_4 = arith.constant 0 : index
    %3 = vector.load %arg3[%c0_3, %c0_4] : memref<1x384xf32, #tpu.memory_space<vmem>>, vector<1x384xf32>
    %4 = vector.broadcast %3 : vector<1x384xf32> to vector<8x384xf32>
    %5 = arith.addf %2, %4 : vector<8x384xf32>
    %6 = vector.extract_strided_slice %5 {offsets = [0, 0], sizes = [8, 128], strides = [1, 1]} : vector<8x384xf32> to vector<8x128xf32>
    %7 = vector.extract_strided_slice %5 {offsets = [0, 128], sizes = [8, 128], strides = [1, 1]} : vector<8x384xf32> to vector<8x128xf32>
    %8 = vector.extract_strided_slice %5 {offsets = [0, 256], sizes = [8, 128], strides = [1, 1]} : vector<8x384xf32> to vector<8x128xf32>
    %9 = arith.mulf %7, %6 : vector<8x128xf32>
    %10 = arith.addf %9, %8 : vector<8x128xf32>
    %cst_5 = arith.constant 0.000000e+00 : f32
    %11 = vector.broadcast %cst_5 : f32 to vector<8x128xf32>
    %12 = arith.cmpf oge, %10, %11 : vector<8x128xf32>
    %cst_6 = arith.constant 0.00999999977 : f32
    %13 = vector.broadcast %cst_6 : f32 to vector<8x128xf32>
    %14 = arith.mulf %13, %10 : vector<8x128xf32>
    %15 = arith.select %12, %10, %14 : vector<8x128xi1>, vector<8x128xf32>
    %c0_7 = arith.constant 0 : index
    %c0_8 = arith.constant 0 : index
    %16 = vector.load %arg4[%c0_7, %c0_8] : memref<8x128xf32, #tpu.memory_space<vmem>>, vector<8x128xf32>
    tpu.vector_store %arg4[%c0_7, %c0_8], %15 {strides = array<i32>} : memref<8x128xf32, #tpu.memory_space<vmem>>, vector<8x128xf32>,
    return
  }
  func.func @transform_0(%arg0: i32) -> (i32, i32) {
    %c0_i32 = arith.constant 0 : i32
    %c0_i32_0 = arith.constant 0 : i32
    return %arg0, %c0_i32 : i32, i32
  }
  func.func @transform_1(%arg0: i32) -> (i32, i32) {
    %c0_i32 = arith.constant 0 : i32
    %c0_i32_0 = arith.constant 0 : i32
    %c0_i32_1 = arith.constant 0 : i32
    return %c0_i32, %c0_i32_0 : i32, i32
  }
  func.func @transform_2(%arg0: i32) -> (i32, i32) {
    %c0_i32 = arith.constant 0 : i32
    %c0_i32_0 = arith.constant 0 : i32
    %c0_i32_1 = arith.constant 0 : i32
    return %c0_i32, %c0_i32_0 : i32, i32
  }
  func.func @transform_3(%arg0: i32) -> (i32, i32) {
    %c0_i32 = arith.constant 0 : i32
    %c0_i32_0 = arith.constant 0 : i32
    return %arg0, %c0_i32 : i32, i32
  }
}

</mosaic_0001>

<llo_original>
// kernel: tpu_custom_call.1
$region0: #{tpu_custom_call.1}
  #allocation0 [shape = 'u32[]', space=smem, size = 0x4, offset = 0x4, fixed_abs, tag = 'smem constant byte address 0x4 - core index']
  #allocation1 [shape = 'u32[144,128]{1,0:T(1,128)}', space=vmem, size = 0x12000, scoped, tag = 'internal scratch']
  %s0 = inlined_call_operand.hbm [shape: f32[8,32], index: 0, kind: input, shape index: {}]
  %s1 = inlined_call_operand.hbm [shape: f32[32,384], index: 1, kind: input, shape index: {}]
  %s2 = inlined_call_operand.vmem [shape: f32[1,384], index: 2, kind: input, shape index: {}]
  %s3 = inlined_call_operand.hbm [shape: f32[8,128], index: 3, kind: output, shape index: {}]
  %s4 = sld [smem:[#allocation0]]
  $region30: #{tpu_custom_call.1} parent=0
    _
  %s6 = ssub.s32 1, %s4
  %s7 = scalar_select 0, %s6, %s4
  $region1: #{tpu_custom_call.1} parent=0
    #allocation2 [shape = 'u8[4096]{0}', space=vmem, size = 0x1000, scoped, tag = 'input window, operand 0, single buffered']
    #allocation3 [shape = 's32[1]{0}', space=sflag, size = 0x4, scoped, tag = 'scoped memory for tpu_custom_call.1']
    #allocation4 [shape = 's32[1]{0}', space=sflag, size = 0x4, scoped, tag = 'scoped memory for tpu_custom_call.1']
    #allocation5 [shape = 'u8[49152]{0}', space=vmem, size = 0xc000, scoped, tag = 'input window, operand 1, single buffered']
    #allocation6 [shape = 's32[1]{0}', space=sflag, size = 0x4, scoped, tag = 'scoped memory for tpu_custom_call.1']
    #allocation7 [shape = 'u8[4096]{0}', space=vmem, size = 0x1000, scoped, tag = 'output window, operand 0, single buffered']
    %8 = vsyncpa [#allocation3], 0
    %9 = vsyncpa [#allocation6], 0
    %10 = vsyncpa [#allocation4], 0
    // Predicated region
    $region2: #{tpu_custom_call.1} parent=1 // pred_check
      _
    $region3: #{tpu_custom_call.1} parent=1 // pred_check_branch
      %12 = sbr.rel (0) target = $region5
    $region4: #{tpu_custom_call.1} parent=1 // pred_region
      %s14 = ssub.s32 128, 128
      %15 = vsyncadd [#allocation3], %s14
      %s17 = sshll.u32 [#allocation2], 4
      %s18 = int_to_ptr.vmem [resolvable:$true] %s17
      %20 = dma.hbm_to_vmem [thread:$0]  %s0, 128, %s18, [#allocation3]
    $region5: #{tpu_custom_call.1} parent=1 // pred_fallthru
      _
    // Predicated region
    $region6: #{tpu_custom_call.1} parent=1 // pred_check
      _
    $region7: #{tpu_custom_call.1} parent=1 // pred_check_branch
      %22 = sbr.rel (0) target = $region9
    $region8: #{tpu_custom_call.1} parent=1 // pred_region
      %s24 = ssub.s32 1536, 1536
      %25 = vsyncadd [#allocation6], %s24
      %s26 = sshll.u32 [#allocation5], 4
      %s27 = int_to_ptr.vmem [resolvable:$true] %s26
      %32 = dma.hbm_to_vmem [thread:$0]  %s1, 1536, %s27, [#allocation6], 384, 384, 24
    $region9: #{tpu_custom_call.1} parent=1 // pred_fallthru
      _
    // Predicated region
    $region10: #{tpu_custom_call.1} parent=1 // pred_check
      _
    $region11: #{tpu_custom_call.1} parent=1 // pred_check_branch
      %34 = sbr.rel (0) target = $region13
    $region12: #{tpu_custom_call.1} parent=1 // pred_region
      _
    $region13: #{tpu_custom_call.1} parent=1 // pred_fallthru
      _
    // Predicated region
    $region14: #{tpu_custom_call.1} parent=1 // pred_check
      _
    $region15: #{tpu_custom_call.1} parent=1 // pred_check_branch
      %36 = sbr.rel (0) target = $region17
    $region16: #{tpu_custom_call.1} parent=1 // pred_region
      %37 = dma.done [#allocation3], 128
    $region17: #{tpu_custom_call.1} parent=1 // pred_fallthru
      _
    // Predicated region
    $region18: #{tpu_custom_call.1} parent=1 // pred_check
      _
    $region19: #{tpu_custom_call.1} parent=1 // pred_check_branch
      %39 = sbr.rel (0) target = $region21
    $region20: #{tpu_custom_call.1} parent=1 // pred_region
      %40 = dma.done [#allocation6], 1536
    $region21: #{tpu_custom_call.1} parent=1 // pred_fallthru
      _
    %v41 = vld [vmem:[#allocation2] sm:$0xff]
    %v42 = vld [vmem:[#allocation5] sm:$0xff]
    %v43 = vld [vmem:[#allocation5 + $0x8] sm:$0xff]
    %v44 = vld [vmem:[#allocation5 + $0x10] sm:$0xff]
    %v45 = vld [vmem:[#allocation5 + $0x18] sm:$0xff]
    %v46 = vld [vmem:[#allocation5 + $0x20] sm:$0xff]
    %v47 = vld [vmem:[#allocation5 + $0x28] sm:$0xff]
    %v48 = vld [vmem:[#allocation5 + $0x30] sm:$0xff]
    %v49 = vld [vmem:[#allocation5 + $0x38] sm:$0xff]
    %v50 = vld [vmem:[#allocation5 + $0x40] sm:$0xff]
    %v51 = vld [vmem:[#allocation5 + $0x48] sm:$0xff]
    %v52 = vld [vmem:[#allocation5 + $0x50] sm:$0xff]
    %v53 = vld [vmem:[#allocation5 + $0x58] sm:$0xff]
    %v54 = vld [vmem:[%s2] sm:$0x7]
    %v56 = vlaneseq
    %v57 = vshrl.u32 %v56, 7
    %v58 = vsub.s32 0, %v57
    %v59 = vrot.slane %v54, %v58
    %v60 = vlaneseq
    %v61 = vshrl.u32 %v60, 7
    %v62 = vsub.s32 1, %v61
    %v63 = vrot.slane %v54, %v62
    %v64 = vlaneseq
    %v65 = vshrl.u32 %v64, 7
    %v66 = vsub.s32 2, %v65
    %v67 = vrot.slane %v54, %v66
    %vm71 = vcmask 261120
    %v73 = vsel %vm71, %v41, 0
    %75 = vmatprep.subr.mxu0 %v43
    %76 = vmatpush1.msra.mxu0 %v42
    %77 = vmatprep.subr.mxu0 %v46
    %78 = vmatpush1.msra.mxu0 %v45
    %79 = vmatprep.subr.mxu0 %v49
    %80 = vmatpush1.msra.mxu0 %v48
    %81 = vmatprep.subr.mxu0 %v52
    %82 = vmatpush1.msra.mxu0 %v51
    %83 = vmatprep.subr.mxu0 0.0
    %84 = vmatpush1.msra.mxu0 0.0
    %85 = vmatprep.subr.mxu0 0.0
    %86 = vmatpush1.msra.mxu0 0.0
    %87 = vmatprep.subr.mxu0 0.0
    %88 = vmatpush1.msra.mxu0 0.0
    %89 = vmatprep.subr.mxu0 0.0
    %90 = vmatpush1.msra.mxu0 0.0
    %91 = vmatprep.subr.mxu0 0.0
    %92 = vmatpush1.msra.mxu0 0.0
    %93 = vmatprep.subr.mxu0 0.0
    %94 = vmatpush1.msra.mxu0 0.0
    %95 = vmatprep.subr.mxu0 0.0
    %96 = vmatpush1.msra.mxu0 0.0
    %97 = vmatprep.subr.mxu0 0.0
    %98 = vmatpush1.msra.mxu0 0.0
    %99 = vmatprep.subr.mxu0 0.0
    %100 = vmatpush1.msra.mxu0 0.0
    %101 = vmatprep.subr.mxu0 0.0
    %102 = vmatpush1.msra.mxu0 0.0
    %103 = vmatprep.subr.mxu0 0.0
    %104 = vmatpush1.msra.mxu0 0.0
    %105 = vmatprep.subr.mxu0 0.0
    %106 = vmatpush1.msra.mxu0 0.0
    %107 = vmatprep.subr.mxu0 0.0
    %108 = vmatpush1.msra.mxu0 0.0
    %109 = vmatprep.subr.mxu0 0.0
    %110 = vmatpush1.msra.mxu0 0.0
    %111 = vmatprep.subr.mxu0 0.0
    %112 = vmatpush1.msra.mxu0 0.0
    %113 = vmatprep.subr.mxu0 0.0
    %114 = vmatpush1.msra.mxu0 0.0
    %115 = vmatprep.subr.mxu0 0.0
    %116 = vmatpush1.msra.mxu0 0.0
    %117 = vmatprep.subr.mxu0 0.0
    %118 = vmatpush1.msra.mxu0 0.0
    %119 = vmatprep.subr.mxu0 0.0
    %120 = vmatpush1.msra.mxu0 0.0
    %121 = vmatprep.subr.mxu0 0.0
    %122 = vmatpush1.msra.mxu0 0.0
    %123 = vmatprep.subr.mxu0 0.0
    %124 = vmatpush1.msra.mxu0 0.0
    %125 = vmatprep.subr.mxu0 0.0
    %126 = vmatpush1.msra.mxu0 0.0
    %127 = vmatprep.subr.mxu0 0.0
    %128 = vmatpush1.msra.mxu0 0.0
    %129 = vmatprep.subr.mxu0 0.0
    %130 = vmatpush1.msra.mxu0 0.0
    %131 = vmatprep.subr.mxu0 0.0
    %132 = vmatpush1.msra.mxu0 0.0
    %133 = vmatprep.subr.mxu0 0.0
    %134 = vmatpush1.msra.mxu0 0.0
    %135 = vmatprep.subr.mxu0 0.0
    %136 = vmatpush1.msra.mxu0 0.0
    %137 = vmatprep.subr.mxu0 0.0
    %138 = vmatpush1.msra.mxu0 0.0
    %139 = vmatprep.mubr.f32.mxu0 0.0
    %140 = vmatmul.mubr.f32.gmra.mrb[0].mxu0 %v73
    %v141 = vpop.f32.mrb[0].mxu0
    %v142 = vadd.f32 %v59, %v141
    %v143 = vpop.f32.mrb[0].mxu0
    %v144 = vadd.f32 %v63, %v143
    %145 = vdwg.mxu0
    %146 = vmatprep.subr.mxu0 0.0
    %147 = vmatpush1.msra.mxu0 %v44
    %148 = vmatprep.subr.mxu0 0.0
    %149 = vmatpush1.msra.mxu0 %v47
    %150 = vmatprep.subr.mxu0 0.0
    %151 = vmatpush1.msra.mxu0 %v50
    %152 = vmatprep.subr.mxu0 0.0
    %153 = vmatpush1.msra.mxu0 %v53
    %154 = vmatprep.subr.mxu0 0.0
    %155 = vmatpush1.msra.mxu0 0.0
    %156 = vmatprep.subr.mxu0 0.0
    %157 = vmatpush1.msra.mxu0 0.0
    %158 = vmatprep.subr.mxu0 0.0
    %159 = vmatpush1.msra.mxu0 0.0
    %160 = vmatprep.subr.mxu0 0.0
    %161 = vmatpush1.msra.mxu0 0.0
    %162 = vmatprep.subr.mxu0 0.0
    %163 = vmatpush1.msra.mxu0 0.0
    %164 = vmatprep.subr.mxu0 0.0
    %165 = vmatpush1.msra.mxu0 0.0
    %166 = vmatprep.subr.mxu0 0.0
    %167 = vmatpush1.msra.mxu0 0.0
    %168 = vmatprep.subr.mxu0 0.0
    %169 = vmatpush1.msra.mxu0 0.0
    %170 = vmatprep.subr.mxu0 0.0
    %171 = vmatpush1.msra.mxu0 0.0
    %172 = vmatprep.subr.mxu0 0.0
    %173 = vmatpush1.msra.mxu0 0.0
    %174 = vmatprep.subr.mxu0 0.0
    %175 = vmatpush1.msra.mxu0 0.0
    %176 = vmatprep.subr.mxu0 0.0
    %177 = vmatpush1.msra.mxu0 0.0
    %178 = vmatprep.subr.mxu0 0.0
    %179 = vmatpush1.msra.mxu0 0.0
    %180 = vmatprep.subr.mxu0 0.0
    %181 = vmatpush1.msra.mxu0 0.0
    %182 = vmatprep.subr.mxu0 0.0
    %183 = vmatpush1.msra.mxu0 0.0
    %184 = vmatprep.subr.mxu0 0.0
    %185 = vmatpush1.msra.mxu0 0.0
    %186 = vmatprep.subr.mxu0 0.0
    %187 = vmatpush1.msra.mxu0 0.0
    %188 = vmatprep.subr.mxu0 0.0
    %189 = vmatpush1.msra.mxu0 0.0
    %190 = vmatprep.subr.mxu0 0.0
    %191 = vmatpush1.msra.mxu0 0.0
    %192 = vmatprep.subr.mxu0 0.0
    %193 = vmatpush1.msra.mxu0 0.0
    %194 = vmatprep.subr.mxu0 0.0
    %195 = vmatpush1.msra.mxu0 0.0
    %196 = vmatprep.subr.mxu0 0.0
    %197 = vmatpush1.msra.mxu0 0.0
    %198 = vmatprep.subr.mxu0 0.0
    %199 = vmatpush1.msra.mxu0 0.0
    %200 = vmatprep.subr.mxu0 0.0
    %201 = vmatpush1.msra.mxu0 0.0
    %202 = vmatprep.subr.mxu0 0.0
    %203 = vmatpush1.msra.mxu0 0.0
    %204 = vmatprep.subr.mxu0 0.0
    %205 = vmatpush1.msra.mxu0 0.0
    %206 = vmatprep.subr.mxu0 0.0
    %207 = vmatpush1.msra.mxu0 0.0
    %208 = vmatprep.subr.mxu0 0.0
    %209 = vmatpush1.msra.mxu0 0.0
    %210 = vmatprep.mubr.f32.mxu0 0.0
    %211 = vmatmul.mubr.f32.gmra.mrb[0].mxu0 %v73
    %v212 = vpop.f32.mrb[0].mxu0
    %v213 = vadd.f32 %v67, %v212
    %v214 = vpop.f32.mrb[0].mxu0
    %215 = vdwg.mxu0
    %v216 = vmul.f32 %v144, %v142
    %v217 = vadd.f32 %v216, %v213
    %vm218 = vcmp.ge.f32.partialorder %v217, 0.0
    %v219 = vmul.f32 %v217, 0.01
    %v220 = vsel %vm218, %v217, %v219
    %221 = vst [vmem:[#allocation7] sm:$0xff] %v220
    // Predicated region
    $region22: #{tpu_custom_call.1} parent=1 // pred_check
      _
    $region23: #{tpu_custom_call.1} parent=1 // pred_check_branch
      %223 = sbr.rel (0) target = $region25
    $region24: #{tpu_custom_call.1} parent=1 // pred_region
      %s225 = ssub.s32 128, 128
      %226 = vsyncadd [#allocation4], %s225
      %s228 = sshll.u32 [#allocation7], 4
      %s229 = int_to_ptr.vmem [resolvable:$true] %s228
      %231 = dma.vmem_to_hbm [thread:$0]  %s229, 128, %s3, [#allocation4]
    $region25: #{tpu_custom_call.1} parent=1 // pred_fallthru
      _
    // Predicated region
    $region26: #{tpu_custom_call.1} parent=1 // pred_check
      _
    $region27: #{tpu_custom_call.1} parent=1 // pred_check_branch
      %233 = sbr.rel (0) target = $region29
    $region28: #{tpu_custom_call.1} parent=1 // pred_region
      %234 = dma.done [#allocation4], 128
    $region29: #{tpu_custom_call.1} parent=1 // pred_fallthru
      _
    %235 = vsyncpa [#allocation3], 1
    %236 = vsyncpa [#allocation6], 1
    %237 = vsyncpa [#allocation4], 1

</llo_original>
